<compile_context>
chip_gen: v5e
topology: v5e:2x2
jax: 0.10.0
libtpu: 0.0.40
codegen_flags: <defaults>
</compile_context>

<pallas_src>
import functools

import numpy as np

import jax
import jax.numpy as jnp
from jax.experimental import pallas as pl
from jax.experimental.pallas import tpu as pltpu

_LANES = 128      # TPU vreg lane width
_SUBLANES = 8     # TPU f32 vreg sublane width


def _round_up(x, m):
    return ((x + m - 1) // m) * m


def _softplus(x):
    # -log(sigmoid(x)) == softplus(-x); logaddexp is the numerically stable form.
    return jnp.logaddexp(0.0, x)


def _row_dot(t, s, embed_dim):
    """Per-row dot product (TB, D) x (TB, D) -> (TB, 1).

    VPU pre-add over lane-aligned 128-wide column blocks (cost ~constant in D,
    no MXU, no relayout-triggering reshapes), then one XLU lane reduce.
    """
    n_full = embed_dim // _LANES
    dot = None
    if n_full > 0:
        acc = t[:, :_LANES] * s[:, :_LANES]
        for j in range(1, n_full):
            lo = j * _LANES
            acc = acc + t[:, lo:lo + _LANES] * s[:, lo:lo + _LANES]
        dot = jnp.sum(acc, axis=-1, keepdims=True)
    rem = embed_dim - n_full * _LANES
    if rem:
        lo = n_full * _LANES
        tail = jnp.sum(t[:, lo:] * s[:, lo:], axis=-1, keepdims=True)
        dot = tail if dot is None else dot + tail
    return dot


def _skipgram_loss_kernel(t_ref, s_ref, o_ref, *, embed_dim):
    """One (batch-tile, slot) grid step.

    t_ref: (TB, D) target embeddings (block index constant across the slot axis,
           so the tile stays VMEM-resident / is DMA'd once per batch tile).
    s_ref: (TB, D) slot embeddings (slot 0 = -context, slots 1..K = negatives).
    o_ref: (8, 128) lane-dense per-tile partial-sum slab (resident accumulator
           across the slot axis).
    """
    k = pl.program_id(1)                              # slot index ("arbitrary")

    t = t_ref[...].astype(jnp.float32)
    s = s_ref[...].astype(jnp.float32)

    score = _row_dot(t, s, embed_dim)                 # (TB, 1)
    part = jnp.sum(_softplus(score), axis=0, keepdims=True)   # (1, 1)
    tile = jnp.broadcast_to(part, (_SUBLANES, _LANES))

    @pl.when(k == 0)
    def _init():
        o_ref[...] = tile

    @pl.when(k != 0)
    def _accumulate():
        o_ref[...] += tile


# ----------------------------------------------------------------------------
# Per-generation sizing helpers.
# ----------------------------------------------------------------------------

def _vmem_capacity_bytes():
    try:
        cap = int(pltpu.get_tpu_info().vmem_capacity_bytes)
        if cap > 0:
            return cap
    except Exception:
        pass
    return 64 * 1024 * 1024          # assume the smallest-VMEM generation (v7x)


def _is_v7():
    try:
        kind = jax.local_devices()[0].device_kind.lower()
        return ("v7" in kind) or ("7x" in kind)
    except Exception:
        return False


def _num_tensorcores():
    info = None
    try:
        info = pltpu.get_tpu_info()
    except Exception:
        info = None
    if info is not None:
        for name in ("num_cores", "core_count", "num_tensorcores",
                     "tensorcore_count"):
            try:
                v = int(getattr(info, name))
                if v > 0:
                    return v
            except Exception:
                pass
    return 2 if _is_v7() else 1


def _pick_block_b(batch, embed_dim, bytes_per_elem):
    """Batch-tile rows: size the two double-buffered (TB, D) streams against the
    running generation's VMEM, then guarantee >= 2 batch tiles per TensorCore so
    megacore chips (v7x) actually shard the 'parallel' axis."""
    big_vmem = (not _is_v7()) and _vmem_capacity_bytes() >= 96 * 1024 * 1024
    in_budget = (44 if big_vmem else 20) * 1024 * 1024
    tb = in_budget // (2 * 2 * embed_dim * bytes_per_elem)   # 2 streams x 2 buffers
    tb = max(_SUBLANES, min(4096, (tb // _SUBLANES) * _SUBLANES))

    batch_r8 = _round_up(batch, _SUBLANES)
    tb = min(tb, batch_r8)

    cores = _num_tensorcores()
    if cores > 1:
        want_tiles = 2 * cores
        cap = max(_SUBLANES, _round_up(-(-batch_r8 // want_tiles), _SUBLANES))
        tb = min(tb, cap)
    return tb


# ----------------------------------------------------------------------------
# Forward pass.
# ----------------------------------------------------------------------------

def skipgram_forward(W_target, W_context, target_ids, context_ids, neg_ids,
                     *, block_b=None, stream_dtype=None):
    """loss = mean(-logsig(<t,c>)) + mean(sum_k -logsig(-<n_k,t>)); matches PyTorch.

    stream_dtype: dtype the gathered embeddings are streamed through the kernel
      in.  Defaults to the table dtype (f32).  jnp.bfloat16 halves the HBM bytes
      of the dominant negatives stream (numerics then differ slightly from f32).
    """
    batch = int(target_ids.shape[0])
    num_neg = int(neg_ids.shape[1])
    num_slots = num_neg + 1                   # slot 0 = positive (context) pair
    embed_dim = int(W_target.shape[1])
    stream_dtype = stream_dtype if stream_dtype is not None else W_target.dtype
    bpe = int(np.dtype(stream_dtype).itemsize)

    if block_b is not None:
        tb = max(_SUBLANES, _round_up(int(block_b), _SUBLANES))
    else:
        tb = _pick_block_b(batch, embed_dim, bpe)
    num_tiles = -(-batch // tb)
    batch_pad = num_tiles * tb
    pad = batch_pad - batch

    # --- embedding gathers stay in XLA (see TODO at top of file) -------------
    tids = jnp.pad(target_ids, (0, pad))
    cids = jnp.pad(context_ids, (0, pad))
    # Slot-major ids: row = slot * batch_pad + b, so every grid step reads a
    # dense, sublane-packed (TB, D) block.  Slot 0 is the context pair.
    nids = jnp.pad(jnp.transpose(neg_ids), ((0, 0), (0, pad)))        # (K, B_pad)
    slot_ids = jnp.concatenate([cids[None, :], nids], axis=0).reshape(-1)

    # Zero padded target rows (fuses into the gather) so each padded row
    # contributes exactly softplus(0) per slot; subtract that constant below
    # instead of masking rows inside the kernel.
    row_ok = (jnp.arange(batch_pad) < batch)[:, None]
    t = jnp.where(row_ok, jnp.take(W_target, tids, axis=0), 0.0).astype(stream_dtype)
    # Negate slot 0 so the kernel applies one uniform softplus(+<t, s>) per slot.
    slot_sign = jnp.where(jnp.arange(num_slots * batch_pad) < batch_pad, -1.0, 1.0)
    s = (jnp.take(W_context, slot_ids, axis=0) * slot_sign[:, None]).astype(stream_dtype)

    # Per-generation VMEM sizing: double-buffered (targets + slot) blocks + output.
    big_vmem = (not _is_v7()) and _vmem_capacity_bytes() >= 96 * 1024 * 1024
    gen_cap = (96 if big_vmem else 48) * 1024 * 1024
    block_set_bytes = 2 * tb * embed_dim * bpe + _SUBLANES * _LANES * 4
    vmem_limit = int(min(gen_cap, max(16 * 1024 * 1024, 4 * block_set_bytes)))

    kernel = functools.partial(_skipgram_loss_kernel, embed_dim=embed_dim)

    partials = pl.pallas_call(
        kernel,
        out_shape=jax.ShapeDtypeStruct((num_tiles * _SUBLANES, _LANES), jnp.float32),
        grid_spec=pltpu.PrefetchScalarGridSpec(
            num_scalar_prefetch=0,
            grid=(num_tiles, num_slots),
            in_specs=[
                # targets: same block across the slot axis (DMA'd once per tile)
                pl.BlockSpec((tb, embed_dim), lambda i, k: (i, 0)),
                # slot stream (context as slot 0, then negatives), slot-major
                pl.BlockSpec((tb, embed_dim), lambda i, k: (k * num_tiles + i, 0)),
            ],
            out_specs=pl.BlockSpec((_SUBLANES, _LANES), lambda i, k: (i, 0)),
        ),
        compiler_params=pltpu.CompilerParams(
            # the slot axis feeds a resident accumulator: must stay "arbitrary".
            dimension_semantics=("parallel", "arbitrary"),
            vmem_limit_bytes=vmem_limit,
        ),
        cost_estimate=pl.CostEstimate(
            flops=int(2 * batch_pad * num_slots * embed_dim),
            transcendentals=int(2 * batch_pad * num_slots),
            bytes_accessed=int((num_slots + 1) * batch_pad * embed_dim * bpe
                               + num_tiles * _SUBLANES * _LANES * 4),
        ),
    )(t, s)

    # Per-tile partial sums (replicated across each (8, 128) slab) -> scalar loss.
    tile_sums = partials.reshape(num_tiles, _SUBLANES, _LANES)[:, 0, 0]
    total = jnp.sum(tile_sums)
    if pad:
        # Remove the padded rows' contribution: softplus(0) per slot per pad row.
        total = total - jnp.float32(pad * num_slots) * jnp.logaddexp(0.0, 0.0)
    return total / jnp.float32(batch)


# ----------------------------------------------------------------------------
# Demo / self-test.
# ----------------------------------------------------------------------------

def xavier_uniform(key, shape):
    fan_in, fan_out = shape
    bound = jnp.sqrt(6.0 / (fan_in + fan_out))
    return jax.random.uniform(key, shape, jnp.float32, -bound, bound)


def _reference_loss(Wt, Wc, tid, cid, nid):
    te = Wt[tid]
    ce = Wc[cid]
    ne = Wc[nid]
    pos = jnp.mean(jnp.logaddexp(0.0, -jnp.sum(te * ce, axis=1)))
    neg = jnp.mean(jnp.sum(
        jnp.logaddexp(0.0, jnp.einsum('bkd,bd->bk', ne, te)), axis=1))
    return pos + neg


if __name__ == "__main__":
    key = jax.random.PRNGKey(0)

    # (vocab, embed_dim, batch, num_neg, forced_tile)
    configs = [
        (50, 32, 20, 5, 8),      # small-D path, multi-tile grid, ragged last tile
        (96, 128, 37, 4, 16),    # lane-block (D % 128 == 0) reduce path
    ]
    for vocab, dim, batch, kneg, forced_tb in configs:
        key, k_wt, k_wc, k_t, k_c, k_n = jax.random.split(key, 6)
        Wt = xavier_uniform(k_wt, (vocab, dim))
        Wc = xavier_uniform(k_wc, (vocab, dim))
        tid = jax.random.randint(k_t, (batch,), 0, vocab)
        cid = jax.random.randint(k_c, (batch,), 0, vocab)
        nid = jax.random.randint(k_n, (batch, kneg), 0, vocab)

        ref = _reference_loss(Wt, Wc, tid, cid, nid)

        # forced small tile: exercises multi-tile grid + padded-row correction
        out_tiled = jax.block_until_ready(
            skipgram_forward(Wt, Wc, tid, cid, nid, block_b=forced_tb))
        assert jnp.allclose(out_tiled, ref, atol=2e-5, rtol=2e-5), (out_tiled, ref)

        # auto-sized tile path (per-generation VMEM / megacore sizing)
        out_auto = jax.block_until_ready(
            skipgram_forward(Wt, Wc, tid, cid, nid))
        assert jnp.allclose(out_auto, ref, atol=2e-5, rtol=2e-5), (out_auto, ref)

    print("KERNEL_OK")
</pallas_src>

<mosaic_0001>
module attributes {stable_mosaic.version = 11 : i64} {
  func.func @_skipgram_loss_kernel(%arg0: i32, %arg1: i32, %arg2: memref<8x32xf32, #tpu.memory_space<vmem>>, %arg3: memref<8x32xf32, #tpu.memory_space<vmem>>, %arg4: memref<8x128xf32, #tpu.memory_space<vmem>>) attributes {dimension_semantics = [#tpu.dimension_semantics<parallel>, #tpu.dimension_semantics<arbitrary>], iteration_bounds = array<i64: 3, 6>, scalar_prefetch = 0 : i64, scratch_operands = 0 : i64, tpu.core_type = #tpu.core_type<tc>, window_params = [{transform_indices = @transform_0, window_bounds = array<i64: 8, 32>}, {transform_indices = @transform_1, window_bounds = array<i64: 8, 32>}, {transform_indices = @transform_2, window_bounds = array<i64: 8, 128>}]} {
    %c0 = arith.constant 0 : index
    %c0_0 = arith.constant 0 : index
    %0 = vector.load %arg2[%c0, %c0_0] : memref<8x32xf32, #tpu.memory_space<vmem>>, vector<8x32xf32>
    %c0_1 = arith.constant 0 : index
    %c0_2 = arith.constant 0 : index
    %1 = vector.load %arg3[%c0_1, %c0_2] : memref<8x32xf32, #tpu.memory_space<vmem>>, vector<8x32xf32>
    %2 = arith.mulf %0, %1 : vector<8x32xf32>
    %cst = arith.constant dense<0.000000e+00> : vector<8xf32>
    %3 = vector.multi_reduction <add>, %2, %cst [1] : vector<8x32xf32> to vector<8xf32>
    %4 = vector.shape_cast %3 : vector<8xf32> to vector<8x1xf32>
    %cst_3 = arith.constant 0.000000e+00 : f32
    %5 = vector.broadcast %cst_3 : f32 to vector<8x1xf32>
    %6 = arith.maximumf %5, %4 : vector<8x1xf32>
    %7 = vector.broadcast %cst_3 : f32 to vector<8x1xf32>
    %8 = arith.subf %7, %4 : vector<8x1xf32>
    %9 = arith.cmpf one, %8, %8 : vector<8x1xf32>
    %10 = vector.broadcast %cst_3 : f32 to vector<8x1xf32>
    %11 = arith.addf %10, %4 : vector<8x1xf32>
    %12 = math.absf %8 : vector<8x1xf32>
    %cst_4 = arith.constant 0.000000e+00 : f32
    %13 = vector.broadcast %cst_4 : f32 to vector<8x1xf32>
    %14 = arith.subf %13, %12 : vector<8x1xf32>
    %15 = math.exp %14 : vector<8x1xf32>
    %16 = math.log1p %15 : vector<8x1xf32>
    %17 = arith.addf %6, %16 : vector<8x1xf32>
    %18 = arith.select %9, %11, %17 : vector<8x1xi1>, vector<8x1xf32>
    %cst_5 = arith.constant dense<0.000000e+00> : vector<1xf32>
    %19 = vector.multi_reduction <add>, %18, %cst_5 [0] : vector<8x1xf32> to vector<1xf32>
    %20 = vector.shape_cast %19 : vector<1xf32> to vector<1x1xf32>
    %21 = vector.shape_cast %20 : vector<1x1xf32> to vector<1x1xf32>
    %22 = vector.broadcast %21 : vector<1x1xf32> to vector<8x128xf32>
    %c0_i32 = arith.constant 0 : i32
    %23 = arith.cmpi eq, %arg1, %c0_i32 : i32
    %24 = arith.extui %23 : i1 to i32
    %c0_i32_6 = arith.constant 0 : i32
    %25 = arith.cmpi ne, %24, %c0_i32_6 : i32
    scf.if %25 {
      %c0_9 = arith.constant 0 : index
      %c0_10 = arith.constant 0 : index
      %29 = vector.load %arg4[%c0_9, %c0_10] : memref<8x128xf32, #tpu.memory_space<vmem>>, vector<8x128xf32>
      tpu.vector_store %arg4[%c0_9, %c0_10], %22 {strides = array<i32>} : memref<8x128xf32, #tpu.memory_space<vmem>>, vector<8x128xf32>,
    } else {
    }
    %c0_i32_7 = arith.constant 0 : i32
    %26 = arith.cmpi ne, %arg1, %c0_i32_7 : i32
    %27 = arith.extui %26 : i1 to i32
    %c0_i32_8 = arith.constant 0 : i32
    %28 = arith.cmpi ne, %27, %c0_i32_8 : i32
    scf.if %28 {
      %c0_9 = arith.constant 0 : index
      %c0_10 = arith.constant 0 : index
      %29 = vector.load %arg4[%c0_9, %c0_10] : memref<8x128xf32, #tpu.memory_space<vmem>>, vector<8x128xf32>
      %30 = arith.addf %29, %22 : vector<8x128xf32>
      %c0_11 = arith.constant 0 : index
      %c0_12 = arith.constant 0 : index
      %31 = vector.load %arg4[%c0_11, %c0_12] : memref<8x128xf32, #tpu.memory_space<vmem>>, vector<8x128xf32>
      tpu.vector_store %arg4[%c0_11, %c0_12], %30 {strides = array<i32>} : memref<8x128xf32, #tpu.memory_space<vmem>>, vector<8x128xf32>,
    } else {
    }
    return
  }
  func.func @transform_0(%arg0: i32, %arg1: i32) -> (i32, i32) {
    %c0_i32 = arith.constant 0 : i32
    %c0_i32_0 = arith.constant 0 : i32
    return %arg0, %c0_i32 : i32, i32
  }
  func.func @transform_1(%arg0: i32, %arg1: i32) -> (i32, i32) {
    %c3_i32 = arith.constant 3 : i32
    %0 = arith.muli %arg1, %c3_i32 : i32
    %1 = arith.addi %0, %arg0 : i32
    %c0_i32 = arith.constant 0 : i32
    %c0_i32_0 = arith.constant 0 : i32
    return %1, %c0_i32 : i32, i32
  }
  func.func @transform_2(%arg0: i32, %arg1: i32) -> (i32, i32) {
    %c0_i32 = arith.constant 0 : i32
    %c0_i32_0 = arith.constant 0 : i32
    return %arg0, %c0_i32 : i32, i32
  }
}

</mosaic_0001>

<llo_original>
// kernel: tpu_custom_call.1
$region0: #{tpu_custom_call.1}
  #allocation0 [shape = 'u32[]', space=smem, size = 0x4, offset = 0x4, fixed_abs, tag = 'smem constant byte address 0x4 - core index']
  #allocation1 [shape = 'u32[72,128]{1,0:T(1,128)}', space=vmem, size = 0x9000, scoped, tag = 'internal scratch']
  %s0 = inlined_call_operand.vmem [shape: f32[24,32], index: 0, kind: input, shape index: {}]
  %s1 = inlined_call_operand.vmem [shape: f32[144,32], index: 1, kind: input, shape index: {}]
  %s2 = inlined_call_operand.hbm [shape: f32[24,128], index: 2, kind: output, shape index: {}]
  %s3 = sld [smem:[#allocation0]]
  $region49: #{tpu_custom_call.1} parent=0
    _
  %s5 = ssub.s32 1, %s3
  %s6 = scalar_select 0, %s5, %s3
  $region1: #{tpu_custom_call.1} parent=0
    #allocation2 [shape = 'u8[8192]{0}', space=vmem, size = 0x2000, scoped, tag = 'output window, operand 0']
    #allocation3 [shape = 's32[2]{0}', space=sflag, size = 0x8, scoped, tag = 'scoped memory for tpu_custom_call.1']
    %7 = vsyncpa [#allocation3], 0
    %s8 = scalar_lea.sflag [#allocation3], 1
    %9 = vsyncpa %s8, 0
    loop: start=0, step=1, limit=20
    $region2: #{tpu_custom_call.1} parent=1 // loop_pre_header
      _
    $region3: #{tpu_custom_call.1} parent=1 // loop_header
      %s11 = sphi 0, %s15
      %p12 = scmp.ge.s32.totalorder %s11, 20
      %s18 = sphi 0, %s30
      %s19 = sphi 0, %s26
      %s20 = sphi 0, %s18
      %s21 = sphi 0, %s19
      %s22 = sphi 0, %s20
      %s23 = sphi 0, %s21
      %s33 = sphi 0, %s35
      %s36 = sphi 0, %s33
      %s37 = sphi 0, %s36
      %s53 = sphi 0, %s37
      %s63 = sphi 0, %s65
      %s66 = sphi 0, %s63
      %s67 = sphi 0, %s66
      %s83 = sphi 0, %s67
      %s89 = sphi 0, %s91
      %s92 = sphi 0, %s89
      %s93 = sphi 0, %s92
      %s109 = sphi 0, %s93
    $region4: #{tpu_custom_call.1} parent=1 // loop_header_branch
      %14 = sbr.rel (%p12) target = $region8
    $region5: #{tpu_custom_call.1} parent=1 // loop_body
      %s16 = ssub.s32 %s11, 1
      %s17 = ssub.s32 %s11, 2
      %s24 = sadd.s32 1, %s19
      %p25 = scmp.ge.s32.totalorder %s24, 6
      %s26 = scalar_select %p25, 0, %s24
      %s27 = sadd.s32 1, %s18
      %s28 = scalar_select %p25, %s27, %s18
      %p29 = scmp.ge.s32.totalorder %s28, 3
      %s30 = scalar_select %p29, 0, %s28
      %s31 = ssub.s32 %s18, %s30
      %p32 = scmp.eq.s32.totalorder %s31, 0
      %s34 = sadd.s32 %s33, 1
      %s35 = scalar_select %p32, %s33, %s34
      %p38 = pneg %p32
      %p39 = scmp.eq.s32.totalorder %s11, 17
      %p40 = por %p38, %p39
      %p41 = scmp.ne.s32.totalorder %s33, %s36
      %p42 = scmp.eq.s32.totalorder %s11, 0
      %p43 = por %p41, %p42
      %p44 = scmp.ne.s32.totalorder %s33, %s36
      %p45 = scmp.eq.s32.totalorder %s16, 17
      %p46 = por %p44, %p45
      %p47 = scmp.ne.s32.totalorder %s36, %s37
      %p48 = scmp.eq.s32.totalorder %s16, 0
      %p49 = por %p47, %p48
      %p50 = scmp.ne.s32.totalorder %s36, %s37
      %p51 = scmp.eq.s32.totalorder %s17, 17
      %p52 = por %p50, %p51
      %p54 = scmp.ne.s32.totalorder %s37, %s53
      %p55 = scmp.eq.s32.totalorder %s17, 0
      %p56 = por %p54, %p55
      %s57 = smul.u32 %s19, 3
      %s58 = sadd.s32 %s57, %s18
      %s59 = smul.u32 %s26, 3
      %s60 = sadd.s32 %s59, %s30
      %s61 = ssub.s32 %s58, %s60
      %p62 = scmp.eq.s32.totalorder %s61, 0
      %s64 = sadd.s32 %s63, 1
      %s65 = scalar_select %p62, %s63, %s64
      %p68 = pneg %p62
      %p69 = scmp.eq.s32.totalorder %s11, 17
      %p70 = por %p68, %p69
      %p71 = scmp.ne.s32.totalorder %s63, %s66
      %p72 = scmp.eq.s32.totalorder %s11, 0
      %p73 = por %p71, %p72
      %p74 = scmp.ne.s32.totalorder %s63, %s66
      %p75 = scmp.eq.s32.totalorder %s16, 17
      %p76 = por %p74, %p75
      %p77 = scmp.ne.s32.totalorder %s66, %s67
      %p78 = scmp.eq.s32.totalorder %s16, 0
      %p79 = por %p77, %p78
      %p80 = scmp.ne.s32.totalorder %s66, %s67
      %p81 = scmp.eq.s32.totalorder %s17, 17
      %p82 = por %p80, %p81
      %p84 = scmp.ne.s32.totalorder %s67, %s83
      %p85 = scmp.eq.s32.totalorder %s17, 0
      %p86 = por %p84, %p85
      %s87 = ssub.s32 %s18, %s30
      %p88 = scmp.eq.s32.totalorder %s87, 0
      %s90 = sadd.s32 %s89, 1
      %s91 = scalar_select %p88, %s89, %s90
      %p94 = pneg %p88
      %p95 = scmp.eq.s32.totalorder %s11, 17
      %p96 = por %p94, %p95
      %p97 = scmp.ne.s32.totalorder %s89, %s92
      %p98 = scmp.eq.s32.totalorder %s11, 0
      %p99 = por %p97, %p98
      %p100 = scmp.ne.s32.totalorder %s89, %s92
      %p101 = scmp.eq.s32.totalorder %s16, 17
      %p102 = por %p100, %p101
      %p103 = scmp.ne.s32.totalorder %s92, %s93
      %p104 = scmp.eq.s32.totalorder %s16, 0
      %p105 = por %p103, %p104
      %p106 = scmp.ne.s32.totalorder %s92, %s93
      %p107 = scmp.eq.s32.totalorder %s17, 17
      %p108 = por %p106, %p107
      %p110 = scmp.ne.s32.totalorder %s93, %s109
      %p111 = scmp.eq.s32.totalorder %s17, 0
      %p112 = por %p110, %p111
      %p113 = scmp.le.s32.totalorder 1, %s11
      %p114 = scmp.lt.s32.totalorder %s11, 19
      %p115 = pnand %p113, %p114
      %p116 = pneg %p115
      // Predicated region
      $region9: #{tpu_custom_call.1} parent=5 // pred_check
        _
      $region10: #{tpu_custom_call.1} parent=5 // pred_check_branch
        %118 = sbr.rel (%p115) target = $region12
      $region11: #{tpu_custom_call.1} parent=5 // pred_region
        %s119 = ssub.s32 %s11, 1
      $region12: #{tpu_custom_call.1} parent=5 // pred_fallthru
        _
      %p120 = scmp.lt.s32.totalorder %s11, 18
      // Predicated region
      $region13: #{tpu_custom_call.1} parent=5 // pred_check
        %p121 = pneg %p120
      $region14: #{tpu_custom_call.1} parent=5 // pred_check_branch
        %123 = sbr.rel (%p121) target = $region16
      $region15: #{tpu_custom_call.1} parent=5 // pred_region
        // Predicated region
        $region17: #{tpu_custom_call.1} parent=15 // pred_check
          %p124 = pneg %p43
        $region18: #{tpu_custom_call.1} parent=15 // pred_check_branch
          %126 = sbr.rel (%p124) target = $region20
        $region19: #{tpu_custom_call.1} parent=15 // pred_region
          %p127 = scmp.lt.s32.totalorder %s18, 2
          %s128 = scalar_select %p127, %s18, 2
          %s129 = smul.addr %s128, 8
          %s130 = scalar_lea.vmem %s0, %s129
        $region20: #{tpu_custom_call.1} parent=15 // pred_fallthru
          _
        // Predicated region
        $region21: #{tpu_custom_call.1} parent=15 // pred_check
          %p131 = pneg %p73
        $region22: #{tpu_custom_call.1} parent=15 // pred_check_branch
          %133 = sbr.rel (%p131) target = $region24
        $region23: #{tpu_custom_call.1} parent=15 // pred_region
          %s134 = smul.u32 %s19, 3
          %s135 = sadd.s32 %s134, %s18
          %p136 = scmp.lt.s32.totalorder %s135, 17
          %s137 = scalar_select %p136, %s135, 17
          %s138 = smul.addr %s137, 8
          %s139 = scalar_lea.vmem %s1, %s138
          %s140 = smul.u32 %s19, 3
          %s141 = sadd.s32 %s140, %s18
        $region24: #{tpu_custom_call.1} parent=15 // pred_fallthru
          _
      $region16: #{tpu_custom_call.1} parent=5 // pred_fallthru
        _
      %p142 = scmp.le.s32.totalorder 1, %s11
      %p143 = scmp.lt.s32.totalorder %s11, 19
      %p144 = pnand %p142, %p143
      %p145 = pneg %p144
      // Predicated region
      $region25: #{tpu_custom_call.1} parent=5 // pred_check
        _
      $region26: #{tpu_custom_call.1} parent=5 // pred_check_branch
        %147 = sbr.rel (%p144) target = $region28
      $region27: #{tpu_custom_call.1} parent=5 // pred_region
        %s148 = ssub.s32 %s11, 1
        %p149 = scmp.lt.s32.totalorder %s20, 2
        %s150 = scalar_select %p149, %s20, 2
        %s151 = smul.addr %s150, 8
        %s152 = scalar_lea.vmem %s0, %s151
        %p153 = pneg %p49
        %p154 = pneg %p46
        %s155 = smul.u32 %s21, 3
        %s156 = sadd.s32 %s155, %s20
        %p157 = scmp.lt.s32.totalorder %s156, 17
        %s158 = scalar_select %p157, %s156, 17
        %s159 = smul.addr %s158, 8
        %s160 = scalar_lea.vmem %s1, %s159
        %p161 = pneg %p79
        %p162 = pneg %p76
        %p163 = pneg %p105
        %p164 = pneg %p102
        %s165 = sand.u32 %s92, 1
        %s166 = scalar_lea.sflag [#allocation3], %s165
        %s167 = sand.u32 %s92, 1
        %s168 = smul.addr %s167, 8
        %s169 = scalar_lea.vmem [#allocation2], %s168
        %p170 = scmp.lt.s32.totalorder %s20, 2
        %s171 = scalar_select %p170, %s20, 2
        %s172 = smul.addr %s171, 8
        %s173 = scalar_lea.vmem %s0, %s172
        %s174 = smul.u32 %s21, 3
        %s175 = sadd.s32 %s174, %s20
        %p176 = scmp.lt.s32.totalorder %s175, 17
        %s177 = scalar_select %p176, %s175, 17
        %s178 = smul.addr %s177, 8
        %s179 = scalar_lea.vmem %s1, %s178
        %s180 = smul.u32 %s21, 3
        %s181 = sadd.s32 %s180, %s20
        %v182 = vld [vmem:[%s173] sm:$0xff]
        %v183 = vld [vmem:[%s179] sm:$0xff]
        %v184 = vmul.f32 %v182, %v183
        %vm185 = vcmask 261120
        %v186 = vsel %vm185, %v184, 0.0
        %187 = vadd.xlane.f32.xlu0 %v186
        %v188 = vpop.xlane.xlu0 %187
        %v189 = vmax.f32 %v188, 0.0
        %v190 = vsub.f32 0.0, %v188
        %vm191 = vcmp.ne.f32.partialorder %v190, %v190
        %v192 = vadd.f32 %v188, 0.0
        %v193 = vand.u32 2147483647, %v190
        %v194 = vsub.f32 0.0, %v193
        %v195 = vmul.f32 %v194, 1.442695
        %v196 = vpow.pop %v195
        %v197 = vadd.f32 %v196, 1.0
        %v198 = vlog2.pop %v197
        %v199 = vmul.f32 %v198, 0.6931472
        %v200 = vmul.f32 -0.5, %v196
        %v201 = vadd.f32 %v200, 1.0
        %v202 = vmul.f32 %v201, %v196
        %v203 = vand.u32 2147483647, %v196
        %vm204 = vcmp.lt.f32.partialorder %v203, 0.0004427343
        %v205 = vsel %vm204, %v202, %v199
        %v206 = vadd.f32 %v189, %v205
        %v207 = vsel %vm191, %v192, %v206
        %v208 = vrot.slane %v207, 4
        %v209 = vadd.f32 %v207, %v208
        %v210 = vrot.slane %v209, 2
        %v211 = vadd.f32 %v209, %v210
        %v212 = vrot.slane %v211, 1
        %v213 = vadd.f32 %v211, %v212
        %p214 = scmp.eq.s32.totalorder %s21, 0
        // Predicated region
        $region29: #{tpu_custom_call.1} parent=27 // pred_check
          %p215 = pneg %p214
        $region30: #{tpu_custom_call.1} parent=27 // pred_check_branch
          %217 = sbr.rel (%p215) target = $region32
        $region31: #{tpu_custom_call.1} parent=27 // pred_region
          %218 = vst [vmem:[%s169] sm:$0xff] %v213
        $region32: #{tpu_custom_call.1} parent=27 // pred_fallthru
          _
        %p219 = scmp.ne.s32.totalorder %s21, 0
        // Predicated region
        $region33: #{tpu_custom_call.1} parent=27 // pred_check
          %p220 = pneg %p219
        $region34: #{tpu_custom_call.1} parent=27 // pred_check_branch
          %222 = sbr.rel (%p220) target = $region36
        $region35: #{tpu_custom_call.1} parent=27 // pred_region
          %v223 = vld [vmem:[%s169] sm:$0xff]
          %v224 = vadd.f32 %v223, %v213
          %225 = vst [vmem:[%s169] sm:$0xff] %v224
        $region36: #{tpu_custom_call.1} parent=27 // pred_fallthru
          _
        %s226 = sand.u32 %s92, 1
        %s227 = scalar_lea.sflag [#allocation3], %s226
        %s228 = sand.u32 %s92, 1
        %s229 = smul.addr %s228, 8
        %s230 = scalar_lea.vmem [#allocation2], %s229
        // Predicated region
        $region37: #{tpu_custom_call.1} parent=27 // pred_check
          %p231 = pneg %p102
        $region38: #{tpu_custom_call.1} parent=27 // pred_check_branch
          %233 = sbr.rel (%p231) target = $region40
        $region39: #{tpu_custom_call.1} parent=27 // pred_region
          %235 = vsyncadd %s227, 0
          %s236 = smul.addr %s20, 8
          %s237 = scalar_lea.hbm %s2, %s236
          %s239 = sshll.u32 %s230, 4
          %s240 = int_to_ptr.vmem [resolvable:$true] %s239
          %s241 = sshll.u32 %s237, 4
          %s242 = int_to_ptr.hbm [resolvable:$true] %s241
          %244 = dma.vmem_to_hbm [thread:$0]  %s240, 128, %s242, %s227
        $region40: #{tpu_custom_call.1} parent=27 // pred_fallthru
          _
      $region28: #{tpu_custom_call.1} parent=5 // pred_fallthru
        _
      %p245 = scmp.le.s32.totalorder 2, %s11
      // Predicated region
      $region41: #{tpu_custom_call.1} parent=5 // pred_check
        %p246 = pneg %p245
      $region42: #{tpu_custom_call.1} parent=5 // pred_check_branch
        %248 = sbr.rel (%p246) target = $region44
      $region43: #{tpu_custom_call.1} parent=5 // pred_region
        %s249 = ssub.s32 %s11, 2
        // Predicated region
        $region45: #{tpu_custom_call.1} parent=43 // pred_check
          %p250 = pneg %p108
        $region46: #{tpu_custom_call.1} parent=43 // pred_check_branch
          %252 = sbr.rel (%p250) target = $region48
        $region47: #{tpu_custom_call.1} parent=43 // pred_region
          %s253 = sand.u32 %s93, 1
          %s254 = scalar_lea.sflag [#allocation3], %s253
          %s255 = sand.u32 %s93, 1
          %s256 = smul.addr %s255, 8
          %s257 = scalar_lea.vmem [#allocation2], %s256
          %259 = dma.done %s254, 128
        $region48: #{tpu_custom_call.1} parent=43 // pred_fallthru
          _
      $region44: #{tpu_custom_call.1} parent=5 // pred_fallthru
        _
    $region6: #{tpu_custom_call.1} parent=1 // loop_footer
      %s15 = sadd.s32 1, %s11
    $region7: #{tpu_custom_call.1} parent=1 // loop_footer_branch
      %10 = sbr.rel target = $region3
    $region8: #{tpu_custom_call.1} parent=1 // loop_exit
      _
    %260 = vsyncpa [#allocation3], 1
    %s261 = scalar_lea.sflag [#allocation3], 1
    %262 = vsyncpa %s261, 1

</llo_original>
